<compile_context>
chip_gen: v7x
topology: tpu7x:2x2x1
jax: 0.10.0
libtpu: 0.0.40
codegen_flags: <defaults>
</compile_context>

<pallas_src>
import math

import jax
import jax.numpy as jnp
from jax.experimental import pallas as pl
from jax.experimental.pallas import tpu as pltpu

HIDDEN = 64
HIDDEN_PAD = 128   # hidden width padded to a full lane dimension
LANE = 128
SUBLANE = 8
MAX_TILE_B = 512


def _round_up(x, m):
    return ((x + m - 1) // m) * m


def _mlp_kernel(x_ref, w1_ref, w2_ref, w3_ref, b_ref, o_ref):
    # x_ref: (TILE_B, S) f32       w*: bf16 (padded)      b_ref: (3, W) f32
    a_pad = o_ref.shape[-1]
    x = x_ref[...].astype(jnp.bfloat16)
    b = b_ref[...]
    h1 = jnp.dot(x, w1_ref[...], preferred_element_type=jnp.float32)
    h1 = jnp.maximum(h1 + b[0:1, :HIDDEN_PAD], 0.0)
    h2 = jnp.dot(h1.astype(jnp.bfloat16), w2_ref[...],
                 preferred_element_type=jnp.float32)
    h2 = jnp.maximum(h2 + b[1:2, :HIDDEN_PAD], 0.0)
    q = jnp.dot(h2.astype(jnp.bfloat16), w3_ref[...],
                preferred_element_type=jnp.float32)
    o_ref[...] = q + b[2:3, :a_pad]


def pack_params(w1, b1, w2, b2, w3, b3, action_size):
    """Pad / pack / downcast parameters once (not per call)."""
    state_size = w1.shape[0]
    a_pad = _round_up(max(action_size, 1), LANE)
    bias_w = max(HIDDEN_PAD, a_pad)

    w1p = jnp.zeros((state_size, HIDDEN_PAD), jnp.float32).at[:, :HIDDEN].set(w1)
    w2p = jnp.zeros((HIDDEN_PAD, HIDDEN_PAD), jnp.float32).at[:HIDDEN, :HIDDEN].set(w2)
    w3p = jnp.zeros((HIDDEN_PAD, a_pad), jnp.float32).at[:HIDDEN, :action_size].set(w3)

    b_packed = jnp.zeros((3, bias_w), jnp.float32)
    b_packed = b_packed.at[0, :HIDDEN].set(b1)
    b_packed = b_packed.at[1, :HIDDEN].set(b2)
    b_packed = b_packed.at[2, :action_size].set(b3)

    return {
        "w1": w1p.astype(jnp.bfloat16),         # (S, 128)
        "w2": w2p.astype(jnp.bfloat16),         # (128, 128)
        "w3": w3p.astype(jnp.bfloat16),         # (128, A_pad)
        "b_packed": b_packed,                   # (3, max(128, A_pad)) f32
        "action_size": action_size,
        "a_pad": a_pad,
    }


def init_params(key, state_size, action_size):
    """Init mimicking torch.nn.Linear default U[-1/sqrt(fan_in), 1/sqrt(fan_in)]."""
    def linear(k, fan_in, fan_out):
        kw, kb = jax.random.split(k)
        bound = 1.0 / math.sqrt(fan_in)
        w = jax.random.uniform(kw, (fan_in, fan_out), jnp.float32, -bound, bound)
        b = jax.random.uniform(kb, (fan_out,), jnp.float32, -bound, bound)
        return w, b

    k1, k2, k3 = jax.random.split(key, 3)
    w1, b1 = linear(k1, state_size, HIDDEN)
    w2, b2 = linear(k2, HIDDEN, HIDDEN)
    w3, b3 = linear(k3, HIDDEN, action_size)
    return pack_params(w1, b1, w2, b2, w3, b3, action_size)


def network_forward(state, params):
    """Forward pass of Network as a single Pallas kernel.

    state:  (B, state_size) or (state_size,) float32
    params: output of init_params / pack_params.
    Returns (B, action_size) (or (action_size,)) float32 Q-values.
    """
    w1, w2, w3 = params["w1"], params["w2"], params["w3"]
    b_packed = params["b_packed"]
    action_size = params["action_size"]
    a_pad = params["a_pad"]

    squeeze = state.ndim == 1
    if squeeze:
        state = state[None, :]
    B, S = state.shape

    # Batch tile: multiple of 8 sublanes, <= MAX_TILE_B, chosen to minimize
    # padding for the given batch (keeps VMEM bounded even on v7x).
    n_tiles = pl.cdiv(B, MAX_TILE_B)
    tile_b = _round_up(pl.cdiv(B, n_tiles), SUBLANE)
    grid_b = pl.cdiv(B, tile_b)
    b_pad = grid_b * tile_b

    x = state.astype(jnp.float32)
    if b_pad != B:
        x = jnp.pad(x, ((0, b_pad - B), (0, 0)))

    out = pl.pallas_call(
        _mlp_kernel,
        out_shape=jax.ShapeDtypeStruct((b_pad, a_pad), jnp.float32),
        grid_spec=pltpu.PrefetchScalarGridSpec(
            num_scalar_prefetch=0,
            grid=(grid_b,),
            in_specs=[
                pl.BlockSpec((tile_b, S), lambda i: (i, 0)),              # x tile
                pl.BlockSpec((S, HIDDEN_PAD), lambda i: (0, 0)),          # w1 (resident)
                pl.BlockSpec((HIDDEN_PAD, HIDDEN_PAD), lambda i: (0, 0)), # w2 (resident)
                pl.BlockSpec((HIDDEN_PAD, a_pad), lambda i: (0, 0)),      # w3 (resident)
                pl.BlockSpec(b_packed.shape, lambda i: (0, 0)),           # packed biases
            ],
            out_specs=pl.BlockSpec((tile_b, a_pad), lambda i: (i, 0)),
        ),
        compiler_params=pltpu.CompilerParams(
            dimension_semantics=("parallel",),
        ),
    )(x, w1, w2, w3, b_packed)

    out = out[:B, :action_size]
    if squeeze:
        out = out[0]
    return out


def _ref_forward(state, params):
    """Pure-JAX reference replicating the kernel's bf16-MXU / f32-accumulate path."""
    if state.ndim == 1:
        state = state[None, :]
    b = params["b_packed"]
    x = state.astype(jnp.bfloat16)
    h1 = jnp.dot(x, params["w1"], preferred_element_type=jnp.float32)
    h1 = jnp.maximum(h1 + b[0:1, :HIDDEN_PAD], 0.0)
    h2 = jnp.dot(h1.astype(jnp.bfloat16), params["w2"],
                 preferred_element_type=jnp.float32)
    h2 = jnp.maximum(h2 + b[1:2, :HIDDEN_PAD], 0.0)
    q = jnp.dot(h2.astype(jnp.bfloat16), params["w3"],
                preferred_element_type=jnp.float32) + b[2:3, :params["a_pad"]]
    return q[:, :params["action_size"]]


if __name__ == "__main__":
    key = jax.random.PRNGKey(0)
    k_params, k_state, k_state2 = jax.random.split(key, 3)

    state_size = 8    # e.g. LunarLander-like small state
    action_size = 4
    batch = 2

    params = init_params(k_params, state_size, action_size)
    state = jax.random.normal(k_state, (batch, state_size), jnp.float32)

    out = jax.block_until_ready(network_forward(state, params))
    ref = _ref_forward(state, params)
    assert out.shape == (batch, action_size)
    assert jnp.allclose(out, ref, atol=1e-3, rtol=1e-3)

    # Exercise the batch-grid / padding path (grid > 1) at a training-like batch.
    big_batch = 520
    state_big = jax.random.normal(k_state2, (big_batch, state_size), jnp.float32)
    out_big = jax.block_until_ready(network_forward(state_big, params))
    ref_big = _ref_forward(state_big, params)
    assert out_big.shape == (big_batch, action_size)
    assert jnp.allclose(out_big, ref_big, atol=1e-3, rtol=1e-3)

    # Single-state (1-D) inference path, like acting in the environment.
    out_1d = jax.block_until_ready(network_forward(state[0], params))
    assert out_1d.shape == (action_size,)
    assert jnp.allclose(out_1d, ref[0], atol=1e-3, rtol=1e-3)

    print("KERNEL_OK")
</pallas_src>

<mosaic_0001>
module attributes {stable_mosaic.version = 11 : i64} {
  func.func @_mlp_kernel(%arg0: i32, %arg1: memref<8x8xf32, #tpu.memory_space<vmem>>, %arg2: memref<8x128xbf16, #tpu.memory_space<vmem>>, %arg3: memref<128x128xbf16, #tpu.memory_space<vmem>>, %arg4: memref<128x128xbf16, #tpu.memory_space<vmem>>, %arg5: memref<3x128xf32, #tpu.memory_space<vmem>>, %arg6: memref<8x128xf32, #tpu.memory_space<vmem>>) attributes {dimension_semantics = [#tpu.dimension_semantics<parallel>], iteration_bounds = array<i64: 1>, scalar_prefetch = 0 : i64, scratch_operands = 0 : i64, tpu.core_type = #tpu.core_type<tc>, window_params = [{transform_indices = @transform_0, window_bounds = array<i64: 8, 8>}, {pipeline_mode = #tpu.pipeline_mode<synchronous>, transform_indices = @transform_1, window_bounds = array<i64: 8, 128>}, {pipeline_mode = #tpu.pipeline_mode<synchronous>, transform_indices = @transform_2, window_bounds = array<i64: 128, 128>}, {pipeline_mode = #tpu.pipeline_mode<synchronous>, transform_indices = @transform_3, window_bounds = array<i64: 128, 128>}, {pipeline_mode = #tpu.pipeline_mode<synchronous>, transform_indices = @transform_4, window_bounds = array<i64: 3, 128>}, {transform_indices = @transform_5, window_bounds = array<i64: 8, 128>}]} {
    %c0 = arith.constant 0 : index
    %c0_0 = arith.constant 0 : index
    %0 = vector.load %arg1[%c0, %c0_0] : memref<8x8xf32, #tpu.memory_space<vmem>>, vector<8x8xf32>
    %1 = arith.truncf %0 : vector<8x8xf32> to vector<8x8xbf16>
    %c0_1 = arith.constant 0 : index
    %c0_2 = arith.constant 0 : index
    %2 = vector.load %arg5[%c0_1, %c0_2] : memref<3x128xf32, #tpu.memory_space<vmem>>, vector<3x128xf32>
    %c0_3 = arith.constant 0 : index
    %c0_4 = arith.constant 0 : index
    %3 = vector.load %arg2[%c0_3, %c0_4] : memref<8x128xbf16, #tpu.memory_space<vmem>>, vector<8x128xbf16>
    %cst = arith.constant dense<0.000000e+00> : vector<8x128xf32>
    %4 = tpu.matmul %1, %3, %cst {dimension_numbers = #tpu.dot_dimension_numbers<[1], [0], [0], [1], [0, 0, 1, 1], [], []>} : vector<8x8xbf16>, vector<8x128xbf16>, vector<8x128xf32> -> vector<8x128xf32>
    %5 = vector.extract_strided_slice %2 {offsets = [0, 0], sizes = [1, 128], strides = [1, 1]} : vector<3x128xf32> to vector<1x128xf32>
    %6 = vector.broadcast %5 : vector<1x128xf32> to vector<8x128xf32>
    %7 = arith.addf %4, %6 : vector<8x128xf32>
    %cst_5 = arith.constant 0.000000e+00 : f32
    %8 = vector.broadcast %cst_5 : f32 to vector<8x128xf32>
    %9 = arith.maximumf %7, %8 : vector<8x128xf32>
    %10 = arith.truncf %9 : vector<8x128xf32> to vector<8x128xbf16>
    %c0_6 = arith.constant 0 : index
    %c0_7 = arith.constant 0 : index
    %11 = vector.load %arg3[%c0_6, %c0_7] : memref<128x128xbf16, #tpu.memory_space<vmem>>, vector<128x128xbf16>
    %cst_8 = arith.constant dense<0.000000e+00> : vector<8x128xf32>
    %12 = tpu.matmul %10, %11, %cst_8 {dimension_numbers = #tpu.dot_dimension_numbers<[1], [0], [0], [1], [0, 0, 1, 1], [], []>} : vector<8x128xbf16>, vector<128x128xbf16>, vector<8x128xf32> -> vector<8x128xf32>
    %13 = vector.extract_strided_slice %2 {offsets = [1, 0], sizes = [1, 128], strides = [1, 1]} : vector<3x128xf32> to vector<1x128xf32>
    %14 = vector.broadcast %13 : vector<1x128xf32> to vector<8x128xf32>
    %15 = arith.addf %12, %14 : vector<8x128xf32>
    %cst_9 = arith.constant 0.000000e+00 : f32
    %16 = vector.broadcast %cst_9 : f32 to vector<8x128xf32>
    %17 = arith.maximumf %15, %16 : vector<8x128xf32>
    %18 = arith.truncf %17 : vector<8x128xf32> to vector<8x128xbf16>
    %c0_10 = arith.constant 0 : index
    %c0_11 = arith.constant 0 : index
    %19 = vector.load %arg4[%c0_10, %c0_11] : memref<128x128xbf16, #tpu.memory_space<vmem>>, vector<128x128xbf16>
    %cst_12 = arith.constant dense<0.000000e+00> : vector<8x128xf32>
    %20 = tpu.matmul %18, %19, %cst_12 {dimension_numbers = #tpu.dot_dimension_numbers<[1], [0], [0], [1], [0, 0, 1, 1], [], []>} : vector<8x128xbf16>, vector<128x128xbf16>, vector<8x128xf32> -> vector<8x128xf32>
    %21 = vector.extract_strided_slice %2 {offsets = [2, 0], sizes = [1, 128], strides = [1, 1]} : vector<3x128xf32> to vector<1x128xf32>
    %22 = vector.broadcast %21 : vector<1x128xf32> to vector<8x128xf32>
    %23 = arith.addf %20, %22 : vector<8x128xf32>
    %c0_13 = arith.constant 0 : index
    %c0_14 = arith.constant 0 : index
    %24 = vector.load %arg6[%c0_13, %c0_14] : memref<8x128xf32, #tpu.memory_space<vmem>>, vector<8x128xf32>
    tpu.vector_store %arg6[%c0_13, %c0_14], %23 {strides = array<i32>} : memref<8x128xf32, #tpu.memory_space<vmem>>, vector<8x128xf32>,
    return
  }
  func.func @transform_0(%arg0: i32) -> (i32, i32) {
    %c0_i32 = arith.constant 0 : i32
    %c0_i32_0 = arith.constant 0 : i32
    return %arg0, %c0_i32 : i32, i32
  }
  func.func @transform_1(%arg0: i32) -> (i32, i32) {
    %c0_i32 = arith.constant 0 : i32
    %c0_i32_0 = arith.constant 0 : i32
    %c0_i32_1 = arith.constant 0 : i32
    return %c0_i32, %c0_i32_0 : i32, i32
  }
  func.func @transform_2(%arg0: i32) -> (i32, i32) {
    %c0_i32 = arith.constant 0 : i32
    %c0_i32_0 = arith.constant 0 : i32
    %c0_i32_1 = arith.constant 0 : i32
    return %c0_i32, %c0_i32_0 : i32, i32
  }
  func.func @transform_3(%arg0: i32) -> (i32, i32) {
    %c0_i32 = arith.constant 0 : i32
    %c0_i32_0 = arith.constant 0 : i32
    %c0_i32_1 = arith.constant 0 : i32
    return %c0_i32, %c0_i32_0 : i32, i32
  }
  func.func @transform_4(%arg0: i32) -> (i32, i32) {
    %c0_i32 = arith.constant 0 : i32
    %c0_i32_0 = arith.constant 0 : i32
    %c0_i32_1 = arith.constant 0 : i32
    return %c0_i32, %c0_i32_0 : i32, i32
  }
  func.func @transform_5(%arg0: i32) -> (i32, i32) {
    %c0_i32 = arith.constant 0 : i32
    %c0_i32_0 = arith.constant 0 : i32
    return %arg0, %c0_i32 : i32, i32
  }
}

</mosaic_0001>

<llo_original>
// kernel: tpu_custom_call.1
$region0: #{tpu_custom_call.1}
  #allocation0 [shape = 'u32[]', space=smem, size = 0x4, offset = 0x4, fixed_abs, tag = 'smem constant byte address 0x4 - core index']
  #allocation1 [shape = 'u32[144,128]{1,0:T(1,128)}', space=vmem, size = 0x12000, scoped, tag = 'internal scratch']
  %s0 = inlined_call_operand.hbm [shape: f32[8,8], index: 0, kind: input, shape index: {}]
  %s1 = inlined_call_operand.hbm [shape: bf16[8,128], index: 1, kind: input, shape index: {}]
  %s2 = inlined_call_operand.hbm [shape: bf16[128,128], index: 2, kind: input, shape index: {}]
  %s3 = inlined_call_operand.hbm [shape: bf16[128,128], index: 3, kind: input, shape index: {}]
  %s4 = inlined_call_operand.vmem [shape: f32[3,128], index: 4, kind: input, shape index: {}]
  %s5 = inlined_call_operand.hbm [shape: f32[8,128], index: 5, kind: output, shape index: {}]
  %s6 = sld [smem:[#allocation0]]
  $region46: #{tpu_custom_call.1} parent=0
    _
  %s8 = ssub.s32 1, %s6
  %s9 = scalar_select 0, %s8, %s6
  $region1: #{tpu_custom_call.1} parent=0
    #allocation2 [shape = 'u8[4096]{0}', space=vmem, size = 0x1000, scoped, tag = 'input window, operand 0, single buffered']
    #allocation3 [shape = 's32[1]{0}', space=sflag, size = 0x4, scoped, tag = 'scoped memory for tpu_custom_call.1']
    #allocation4 [shape = 's32[1]{0}', space=sflag, size = 0x4, scoped, tag = 'scoped memory for tpu_custom_call.1']
    #allocation5 [shape = 'u8[2048]{0}', space=vmem, size = 0x800, scoped, tag = 'input window, operand 1, single buffered']
    #allocation6 [shape = 's32[1]{0}', space=sflag, size = 0x4, scoped, tag = 'scoped memory for tpu_custom_call.1']
    #allocation7 [shape = 'u8[32768]{0}', space=vmem, size = 0x8000, scoped, tag = 'input window, operand 2, single buffered']
    #allocation8 [shape = 'u8[32768]{0}', space=vmem, size = 0x8000, scoped, tag = 'input window, operand 3, single buffered']
    #allocation9 [shape = 's32[1]{0}', space=sflag, size = 0x4, scoped, tag = 'scoped memory for tpu_custom_call.1']
    #allocation10 [shape = 'u8[4096]{0}', space=vmem, size = 0x1000, scoped, tag = 'output window, operand 0, single buffered']
    %10 = vsyncpa [#allocation3], 0
    %11 = vsyncpa [#allocation6], 0
    %12 = vsyncpa [#allocation9], 0
    %13 = vsyncpa [#allocation4], 0
    // Predicated region
    $region2: #{tpu_custom_call.1} parent=1 // pred_check
      _
    $region3: #{tpu_custom_call.1} parent=1 // pred_check_branch
      %15 = sbr.rel (0) target = $region5
    $region4: #{tpu_custom_call.1} parent=1 // pred_region
      %s17 = ssub.s32 128, 128
      %18 = vsyncadd [#allocation3], %s17
      %s20 = sshll.u32 [#allocation2], 4
      %s21 = int_to_ptr.vmem [resolvable:$true] %s20
      %23 = dma.hbm_to_vmem [thread:$0]  %s0, 128, %s21, [#allocation3]
    $region5: #{tpu_custom_call.1} parent=1 // pred_fallthru
      _
    // Predicated region
    $region6: #{tpu_custom_call.1} parent=1 // pred_check
      _
    $region7: #{tpu_custom_call.1} parent=1 // pred_check_branch
      %25 = sbr.rel (0) target = $region9
    $region8: #{tpu_custom_call.1} parent=1 // pred_region
      %s27 = ssub.s32 64, 64
      %28 = vsyncadd [#allocation6], %s27
      %s30 = sshll.u32 [#allocation5], 4
      %s31 = int_to_ptr.vmem [resolvable:$true] %s30
      %33 = dma.hbm_to_vmem [thread:$0]  %s1, 64, %s31, [#allocation6]
    $region9: #{tpu_custom_call.1} parent=1 // pred_fallthru
      _
    // Predicated region
    $region10: #{tpu_custom_call.1} parent=1 // pred_check
      _
    $region11: #{tpu_custom_call.1} parent=1 // pred_check_branch
      %35 = sbr.rel (0) target = $region13
    $region12: #{tpu_custom_call.1} parent=1 // pred_region
      %s37 = ssub.s32 1024, 1024
      %38 = vsyncadd [#allocation6], %s37
      %s39 = sshll.u32 [#allocation7], 4
      %s40 = int_to_ptr.vmem [resolvable:$true] %s39
      %45 = dma.hbm_to_vmem [thread:$0]  %s2, 1024, %s40, [#allocation6], 64, 64, 4
    $region13: #{tpu_custom_call.1} parent=1 // pred_fallthru
      _
    // Predicated region
    $region14: #{tpu_custom_call.1} parent=1 // pred_check
      _
    $region15: #{tpu_custom_call.1} parent=1 // pred_check_branch
      %47 = sbr.rel (0) target = $region17
    $region16: #{tpu_custom_call.1} parent=1 // pred_region
      %s49 = ssub.s32 1024, 1024
      %50 = vsyncadd [#allocation9], %s49
      %s51 = sshll.u32 [#allocation8], 4
      %s52 = int_to_ptr.vmem [resolvable:$true] %s51
      %57 = dma.hbm_to_vmem [thread:$0]  %s3, 1024, %s52, [#allocation9], 64, 64, 4
    $region17: #{tpu_custom_call.1} parent=1 // pred_fallthru
      _
    // Predicated region
    $region18: #{tpu_custom_call.1} parent=1 // pred_check
      _
    $region19: #{tpu_custom_call.1} parent=1 // pred_check_branch
      %59 = sbr.rel (0) target = $region21
    $region20: #{tpu_custom_call.1} parent=1 // pred_region
      _
    $region21: #{tpu_custom_call.1} parent=1 // pred_fallthru
      _
    // Predicated region
    $region22: #{tpu_custom_call.1} parent=1 // pred_check
      _
    $region23: #{tpu_custom_call.1} parent=1 // pred_check_branch
      %61 = sbr.rel (0) target = $region25
    $region24: #{tpu_custom_call.1} parent=1 // pred_region
      %62 = dma.done [#allocation3], 128
    $region25: #{tpu_custom_call.1} parent=1 // pred_fallthru
      _
    // Predicated region
    $region26: #{tpu_custom_call.1} parent=1 // pred_check
      _
    $region27: #{tpu_custom_call.1} parent=1 // pred_check_branch
      %64 = sbr.rel (0) target = $region29
    $region28: #{tpu_custom_call.1} parent=1 // pred_region
      %65 = dma.done [#allocation6], 64
    $region29: #{tpu_custom_call.1} parent=1 // pred_fallthru
      _
    // Predicated region
    $region30: #{tpu_custom_call.1} parent=1 // pred_check
      _
    $region31: #{tpu_custom_call.1} parent=1 // pred_check_branch
      %67 = sbr.rel (0) target = $region33
    $region32: #{tpu_custom_call.1} parent=1 // pred_region
      %68 = dma.done [#allocation6], 1024
    $region33: #{tpu_custom_call.1} parent=1 // pred_fallthru
      _
    // Predicated region
    $region34: #{tpu_custom_call.1} parent=1 // pred_check
      _
    $region35: #{tpu_custom_call.1} parent=1 // pred_check_branch
      %70 = sbr.rel (0) target = $region37
    $region36: #{tpu_custom_call.1} parent=1 // pred_region
      %71 = dma.done [#allocation9], 1024
    $region37: #{tpu_custom_call.1} parent=1 // pred_fallthru
      _
    %v73 = vld [vmem:[#allocation2] sm:$0xff]
    %v74 = vpack.c.bf16 %v73, %v73
    %v75 = vld [vmem:[%s4] sm:$0x7]
    %v76 = vld [vmem:[#allocation5] sm:$0xf]
    %v77 = vlaneseq
    %v78 = vshrl.u32 %v77, 7
    %v79 = vsub.s32 0, %v78
    %v80 = vrot.slane %v75, %v79
    %vm81 = vcmask 64512
    %v83 = vsel %vm81, %v74, 0
    %vm85 = vcmask 1043456
    %v87 = vsel %vm85, %v76, 0
    %89 = vmatprep.subr.bf16.mxu0 0
    %90 = vmatpush1.bf16.msra.mxu0 %v87
    %91 = vmatprep.subr.bf16.mxu0 0
    %92 = vmatpush1.bf16.msra.mxu0 0
    %93 = vmatprep.subr.bf16.mxu0 0
    %94 = vmatpush1.bf16.msra.mxu0 0
    %95 = vmatprep.subr.bf16.mxu0 0
    %96 = vmatpush1.bf16.msra.mxu0 0
    %97 = vmatprep.subr.bf16.mxu0 0
    %98 = vmatpush1.bf16.msra.mxu0 0
    %99 = vmatprep.subr.bf16.mxu0 0
    %100 = vmatpush1.bf16.msra.mxu0 0
    %101 = vmatprep.subr.bf16.mxu0 0
    %102 = vmatpush1.bf16.msra.mxu0 0
    %103 = vmatprep.subr.bf16.mxu0 0
    %104 = vmatpush1.bf16.msra.mxu0 0
    %105 = vmatprep.subr.bf16.mxu0 0
    %106 = vmatpush1.bf16.msra.mxu0 0
    %107 = vmatprep.subr.bf16.mxu0 0
    %108 = vmatpush1.bf16.msra.mxu0 0
    %109 = vmatprep.subr.bf16.mxu0 0
    %110 = vmatpush1.bf16.msra.mxu0 0
    %111 = vmatprep.subr.bf16.mxu0 0
    %112 = vmatpush1.bf16.msra.mxu0 0
    %113 = vmatprep.subr.bf16.mxu0 0
    %114 = vmatpush1.bf16.msra.mxu0 0
    %115 = vmatprep.subr.bf16.mxu0 0
    %116 = vmatpush1.bf16.msra.mxu0 0
    %117 = vmatprep.subr.bf16.mxu0 0
    %118 = vmatpush1.bf16.msra.mxu0 0
    %119 = vmatprep.subr.bf16.mxu0 0
    %120 = vmatpush1.bf16.msra.mxu0 0
    %121 = vmatprep.mubr.bf16.mxu0 0
    %122 = vmatmul.mubr.bf16.gmra.mrb[0].mxu0 %v83
    %v123 = vpop.f32.mrb[0].mxu0
    %v124 = vadd.f32 %v80, %v123
    %v125 = vpop.f32.mrb[0].mxu0
    %v126 = vpop.f32.mrb[0].mxu0
    %v127 = vpop.f32.mrb[0].mxu0
    %128 = vdwg.mxu0
    %v129 = vmax.f32 %v124, 0.0
    %v130 = vpack.c.bf16 %v129, %v129
    %v131 = vld [vmem:[#allocation7] sm:$0xf]
    %v132 = vld [vmem:[#allocation7 + $0x4] sm:$0xf]
    %v133 = vld [vmem:[#allocation7 + $0x8] sm:$0xf]
    %v134 = vld [vmem:[#allocation7 + $0xc] sm:$0xf]
    %v135 = vld [vmem:[#allocation7 + $0x10] sm:$0xf]
    %v136 = vld [vmem:[#allocation7 + $0x14] sm:$0xf]
    %v137 = vld [vmem:[#allocation7 + $0x18] sm:$0xf]
    %v138 = vld [vmem:[#allocation7 + $0x1c] sm:$0xf]
    %v139 = vld [vmem:[#allocation7 + $0x20] sm:$0xf]
    %v140 = vld [vmem:[#allocation7 + $0x24] sm:$0xf]
    %v141 = vld [vmem:[#allocation7 + $0x28] sm:$0xf]
    %v142 = vld [vmem:[#allocation7 + $0x2c] sm:$0xf]
    %v143 = vld [vmem:[#allocation7 + $0x30] sm:$0xf]
    %v144 = vld [vmem:[#allocation7 + $0x34] sm:$0xf]
    %v145 = vld [vmem:[#allocation7 + $0x38] sm:$0xf]
    %v146 = vld [vmem:[#allocation7 + $0x3c] sm:$0xf]
    %v147 = vlaneseq
    %v148 = vshrl.u32 %v147, 7
    %v149 = vsub.s32 1, %v148
    %v150 = vrot.slane %v75, %v149
    %v167 = vunpack.c.l.b16 %v131
    %v168 = vunpack.c.l.b16 %v132
    %v169 = vunpack.c.l.b16 %v133
    %v170 = vunpack.c.l.b16 %v134
    %v171 = vunpack.c.l.b16 %v135
    %v172 = vunpack.c.l.b16 %v136
    %v173 = vunpack.c.l.b16 %v137
    %v174 = vunpack.c.l.b16 %v138
    %v175 = vunpack.c.l.b16 %v139
    %v176 = vunpack.c.l.b16 %v140
    %v177 = vunpack.c.l.b16 %v141
    %v178 = vunpack.c.l.b16 %v142
    %v179 = vunpack.c.l.b16 %v143
    %v180 = vunpack.c.l.b16 %v144
    %v181 = vunpack.c.l.b16 %v145
    %v182 = vunpack.c.l.b16 %v146
    %v183 = vpack.c.b16 %v168, %v167
    %v184 = vpack.c.b16 %v170, %v169
    %v185 = vpack.c.b16 %v172, %v171
    %v186 = vpack.c.b16 %v174, %v173
    %v187 = vpack.c.b16 %v176, %v175
    %v188 = vpack.c.b16 %v178, %v177
    %v189 = vpack.c.b16 %v180, %v179
    %v190 = vpack.c.b16 %v182, %v181
    %199 = vmatprep.subr.bf16.mxu0 0
    %200 = vmatpush1.bf16.msra.mxu0 %v183
    %201 = vmatprep.subr.bf16.mxu0 0
    %202 = vmatpush1.bf16.msra.mxu0 %v184
    %203 = vmatprep.subr.bf16.mxu0 0
    %204 = vmatpush1.bf16.msra.mxu0 %v185
    %205 = vmatprep.subr.bf16.mxu0 0
    %206 = vmatpush1.bf16.msra.mxu0 %v186
    %207 = vmatprep.subr.bf16.mxu0 0
    %208 = vmatpush1.bf16.msra.mxu0 %v187
    %209 = vmatprep.subr.bf16.mxu0 0
    %210 = vmatpush1.bf16.msra.mxu0 %v188
    %211 = vmatprep.subr.bf16.mxu0 0
    %212 = vmatpush1.bf16.msra.mxu0 %v189
    %213 = vmatprep.subr.bf16.mxu0 0
    %214 = vmatpush1.bf16.msra.mxu0 %v190
    %215 = vmatprep.subr.bf16.mxu0 0
    %216 = vmatpush1.bf16.msra.mxu0 0
    %217 = vmatprep.subr.bf16.mxu0 0
    %218 = vmatpush1.bf16.msra.mxu0 0
    %219 = vmatprep.subr.bf16.mxu0 0
    %220 = vmatpush1.bf16.msra.mxu0 0
    %221 = vmatprep.subr.bf16.mxu0 0
    %222 = vmatpush1.bf16.msra.mxu0 0
    %223 = vmatprep.subr.bf16.mxu0 0
    %224 = vmatpush1.bf16.msra.mxu0 0
    %225 = vmatprep.subr.bf16.mxu0 0
    %226 = vmatpush1.bf16.msra.mxu0 0
    %227 = vmatprep.subr.bf16.mxu0 0
    %228 = vmatpush1.bf16.msra.mxu0 0
    %229 = vmatprep.subr.bf16.mxu0 0
    %230 = vmatpush1.bf16.msra.mxu0 0
    %231 = vmatprep.mubr.bf16.mxu0 0
    %232 = vmatmul.mubr.bf16.gmra.mrb[0].mxu0 %v130
    %v233 = vpop.f32.mrb[0].mxu0
    %v234 = vadd.f32 %v150, %v233
    %v235 = vpop.f32.mrb[0].mxu0
    %v236 = vpop.f32.mrb[0].mxu0
    %v237 = vpop.f32.mrb[0].mxu0
    %238 = vdwg.mxu0
    %v239 = vmax.f32 %v234, 0.0
    %v240 = vpack.c.bf16 %v239, %v239
    %v241 = vld [vmem:[#allocation8] sm:$0xf]
    %v242 = vld [vmem:[#allocation8 + $0x4] sm:$0xf]
    %v243 = vld [vmem:[#allocation8 + $0x8] sm:$0xf]
    %v244 = vld [vmem:[#allocation8 + $0xc] sm:$0xf]
    %v245 = vld [vmem:[#allocation8 + $0x10] sm:$0xf]
    %v246 = vld [vmem:[#allocation8 + $0x14] sm:$0xf]
    %v247 = vld [vmem:[#allocation8 + $0x18] sm:$0xf]
    %v248 = vld [vmem:[#allocation8 + $0x1c] sm:$0xf]
    %v249 = vld [vmem:[#allocation8 + $0x20] sm:$0xf]
    %v250 = vld [vmem:[#allocation8 + $0x24] sm:$0xf]
    %v251 = vld [vmem:[#allocation8 + $0x28] sm:$0xf]
    %v252 = vld [vmem:[#allocation8 + $0x2c] sm:$0xf]
    %v253 = vld [vmem:[#allocation8 + $0x30] sm:$0xf]
    %v254 = vld [vmem:[#allocation8 + $0x34] sm:$0xf]
    %v255 = vld [vmem:[#allocation8 + $0x38] sm:$0xf]
    %v256 = vld [vmem:[#allocation8 + $0x3c] sm:$0xf]
    %v257 = vlaneseq
    %v258 = vshrl.u32 %v257, 7
    %v259 = vsub.s32 2, %v258
    %v260 = vrot.slane %v75, %v259
    %v277 = vunpack.c.l.b16 %v241
    %v278 = vunpack.c.l.b16 %v242
    %v279 = vunpack.c.l.b16 %v243
    %v280 = vunpack.c.l.b16 %v244
    %v281 = vunpack.c.l.b16 %v245
    %v282 = vunpack.c.l.b16 %v246
    %v283 = vunpack.c.l.b16 %v247
    %v284 = vunpack.c.l.b16 %v248
    %v285 = vunpack.c.l.b16 %v249
    %v286 = vunpack.c.l.b16 %v250
    %v287 = vunpack.c.l.b16 %v251
    %v288 = vunpack.c.l.b16 %v252
    %v289 = vunpack.c.l.b16 %v253
    %v290 = vunpack.c.l.b16 %v254
    %v291 = vunpack.c.l.b16 %v255
    %v292 = vunpack.c.l.b16 %v256
    %v293 = vpack.c.b16 %v278, %v277
    %v294 = vpack.c.b16 %v280, %v279
    %v295 = vpack.c.b16 %v282, %v281
    %v296 = vpack.c.b16 %v284, %v283
    %v297 = vpack.c.b16 %v286, %v285
    %v298 = vpack.c.b16 %v288, %v287
    %v299 = vpack.c.b16 %v290, %v289
    %v300 = vpack.c.b16 %v292, %v291
    %309 = vmatprep.subr.bf16.mxu0 0
    %310 = vmatpush1.bf16.msra.mxu0 %v293
    %311 = vmatprep.subr.bf16.mxu0 0
    %312 = vmatpush1.bf16.msra.mxu0 %v294
    %313 = vmatprep.subr.bf16.mxu0 0
    %314 = vmatpush1.bf16.msra.mxu0 %v295
    %315 = vmatprep.subr.bf16.mxu0 0
    %316 = vmatpush1.bf16.msra.mxu0 %v296
    %317 = vmatprep.subr.bf16.mxu0 0
    %318 = vmatpush1.bf16.msra.mxu0 %v297
    %319 = vmatprep.subr.bf16.mxu0 0
    %320 = vmatpush1.bf16.msra.mxu0 %v298
    %321 = vmatprep.subr.bf16.mxu0 0
    %322 = vmatpush1.bf16.msra.mxu0 %v299
    %323 = vmatprep.subr.bf16.mxu0 0
    %324 = vmatpush1.bf16.msra.mxu0 %v300
    %325 = vmatprep.subr.bf16.mxu0 0
    %326 = vmatpush1.bf16.msra.mxu0 0
    %327 = vmatprep.subr.bf16.mxu0 0
    %328 = vmatpush1.bf16.msra.mxu0 0
    %329 = vmatprep.subr.bf16.mxu0 0
    %330 = vmatpush1.bf16.msra.mxu0 0
    %331 = vmatprep.subr.bf16.mxu0 0
    %332 = vmatpush1.bf16.msra.mxu0 0
    %333 = vmatprep.subr.bf16.mxu0 0
    %334 = vmatpush1.bf16.msra.mxu0 0
    %335 = vmatprep.subr.bf16.mxu0 0
    %336 = vmatpush1.bf16.msra.mxu0 0
    %337 = vmatprep.subr.bf16.mxu0 0
    %338 = vmatpush1.bf16.msra.mxu0 0
    %339 = vmatprep.subr.bf16.mxu0 0
    %340 = vmatpush1.bf16.msra.mxu0 0
    %341 = vmatprep.mubr.bf16.mxu0 0
    %342 = vmatmul.mubr.bf16.gmra.mrb[0].mxu0 %v240
    %v343 = vpop.f32.mrb[0].mxu0
    %v344 = vadd.f32 %v260, %v343
    %v345 = vpop.f32.mrb[0].mxu0
    %v346 = vpop.f32.mrb[0].mxu0
    %v347 = vpop.f32.mrb[0].mxu0
    %348 = vdwg.mxu0
    %349 = vst [vmem:[#allocation10] sm:$0xff] %v344
    // Predicated region
    $region38: #{tpu_custom_call.1} parent=1 // pred_check
      _
    $region39: #{tpu_custom_call.1} parent=1 // pred_check_branch
      %351 = sbr.rel (0) target = $region41
    $region40: #{tpu_custom_call.1} parent=1 // pred_region
      %s353 = ssub.s32 128, 128
      %354 = vsyncadd [#allocation4], %s353
      %s356 = sshll.u32 [#allocation10], 4
      %s357 = int_to_ptr.vmem [resolvable:$true] %s356
      %359 = dma.vmem_to_hbm [thread:$0]  %s357, 128, %s5, [#allocation4]
    $region41: #{tpu_custom_call.1} parent=1 // pred_fallthru
      _
    // Predicated region
    $region42: #{tpu_custom_call.1} parent=1 // pred_check
      _
    $region43: #{tpu_custom_call.1} parent=1 // pred_check_branch
      %361 = sbr.rel (0) target = $region45
    $region44: #{tpu_custom_call.1} parent=1 // pred_region
      %362 = dma.done [#allocation4], 128
    $region45: #{tpu_custom_call.1} parent=1 // pred_fallthru
      _
    %363 = vsyncpa [#allocation3], 1
    %364 = vsyncpa [#allocation6], 1
    %365 = vsyncpa [#allocation9], 1
    %366 = vsyncpa [#allocation4], 1

</llo_original>
